<compile_context>
chip_gen: v7x
topology: tpu7x:2x2x1
jax: 0.10.0
libtpu: 0.0.40
codegen_flags: <defaults>
</compile_context>

<pallas_src>
import functools

import jax
import jax.numpy as jnp
from jax.experimental import pallas as pl
from jax.experimental.pallas import tpu as pltpu


# ---------------------------------------------------------------------------
# Kernel
# ---------------------------------------------------------------------------
def _scale_kernel(factor_ref, x_ref, o_ref):
    # factor_ref: (1,) f32 in SMEM; x_ref/o_ref: (block_r, block_t) f32 in VMEM.
    o_ref[...] = x_ref[...] * factor_ref[0]


# Tile-size policy (memory-bound elementwise op):
#   * last dim: multiple of 128 (lane-dense, unmasked vst) or the full dim,
#   * second-to-last dim: multiple of 8 or the full dim,
#   * <= ~2 MiB per block so in+out double-buffered (4x) fits every
#     generation's default scoped VMEM without raising vmem_limit_bytes.
_MAX_BLOCK_BYTES = 2 * 1024 * 1024
_MAX_BLOCK_LANES = 4096


def _choose_blocks(R, T, itemsize):
    # Lane (last) dim: must be a multiple of 128 or equal to the full dim.
    if T % 128 == 0:
        block_t = min(T, _MAX_BLOCK_LANES)
    else:
        block_t = T
    # Sublane dim: must be a multiple of 8 or equal to the full dim.
    if R % 8 != 0:
        return R, block_t
    rows_budget = max(8, (_MAX_BLOCK_BYTES // (block_t * itemsize)) // 8 * 8)
    block_r = min(R, rows_budget)
    # Prefer >=2 grid steps on large arrays so v7x can shard the 'parallel'
    # axis across both TensorCores (no-op on v5e/v6e).
    if (block_r == R and pl.cdiv(T, block_t) == 1 and R >= 16
            and R * T * itemsize >= (1 << 20)):
        block_r = max(8, ((R // 2) + 7) // 8 * 8)
    return block_r, block_t


@functools.partial(jax.jit,
                   static_argnames=("block_r", "block_t"),
                   donate_argnums=(0,))
def _scale_pallas(x2d, factor_scalar, *, block_r, block_t):
    """In-place-style elementwise multiply of an (R, T) array by a scalar."""
    R, T = x2d.shape
    grid = (pl.cdiv(R, block_r), pl.cdiv(T, block_t))
    factor_arr = jnp.reshape(factor_scalar.astype(jnp.float32), (1,))
    return pl.pallas_call(
        _scale_kernel,
        out_shape=jax.ShapeDtypeStruct((R, T), x2d.dtype),
        grid=grid,
        in_specs=[
            pl.BlockSpec(memory_space=pltpu.SMEM),                   # factor
            pl.BlockSpec((block_r, block_t), lambda i, j: (i, j)),   # x tile
        ],
        out_specs=pl.BlockSpec((block_r, block_t), lambda i, j: (i, j)),
        # Alias x2d (input index 1, after the SMEM factor) onto the output so
        # the scale is done in place in the donated buffer (no second HBM
        # allocation / materialization).
        input_output_aliases={1: 0},
        compiler_params=pltpu.CompilerParams(
            dimension_semantics=("parallel", "parallel")),
    )(factor_arr, x2d)


# ---------------------------------------------------------------------------
# Module port
# ---------------------------------------------------------------------------
def rand_amp_att_1d(x, key, *, chance=0.5, factor=2.0, lines=None, labels=None,
                    faithful=True):
    """JAX/Pallas port of RandAmpAtt1D.forward.

    x: (B, C, T) float32 signal batch.  Returns (x_out, lines, labels).

    faithful=True  -> bit-identical to the PyTorch module (x.mul() result is
                      discarded, so x is returned unchanged; kernel skipped).
    faithful=False -> intended behaviour: x is scaled in place by a random
                      factor with probability `chance`.
    """
    # __init__ semantics: factor = max(1/FACTOR, FACTOR)
    factor = max(1.0 / factor, factor)

    k_apply, k_factor = jax.random.split(key)
    # np.random.uniform() < chance -> apply the transform.  Resolve on host so
    # we never pay an HBM read+write just to multiply by 1.0.
    apply = bool(jax.random.uniform(k_apply) < chance)

    if faithful or not apply:
        # Reference does `x.mul(factor)` (non in-place) and drops the result,
        # and/or the coin flip said "don't apply": x is unchanged, no kernel.
        return x, lines, labels

    # Only sample the factor when it is actually used.
    f = jax.random.uniform(k_factor, minval=1.0 / factor, maxval=factor)

    B, C, T = x.shape
    x2d = x.reshape(B * C, T)                       # lane-dense 2-D view
    block_r, block_t = _choose_blocks(B * C, T, x.dtype.itemsize)
    y2d = _scale_pallas(x2d, f, block_r=block_r, block_t=block_t)
    return y2d.reshape(B, C, T), lines, labels


# ---------------------------------------------------------------------------
# Self-test
# ---------------------------------------------------------------------------
if __name__ == "__main__":
    key = jax.random.PRNGKey(0)
    kx, kt = jax.random.split(key)

    B, C, T = 2, 4, 256  # small 1-D signal batch; B*C = 8 rows, T = 256 lanes
    x = jax.random.normal(kx, (B, C, T), dtype=jnp.float32)

    # Faithful path: matches the PyTorch module exactly (x unchanged), and no
    # kernel is launched at all.
    y, lines, labels = rand_amp_att_1d(x, kt, chance=0.5, factor=2.0,
                                       faithful=True)
    y = jax.block_until_ready(y)
    assert jnp.allclose(y, x), "faithful path must return x unchanged"

    # Intended path: force apply (chance=1.0) and exercise the Pallas kernel.
    y2, _, _ = rand_amp_att_1d(x, kt, chance=1.0, factor=2.0, faithful=False)
    y2 = jax.block_until_ready(y2)

    # Pure-JAX reference for the intended path (same key split / sampling).
    _, k_factor = jax.random.split(kt)
    f_ref = jax.random.uniform(k_factor, minval=0.5, maxval=2.0)
    assert jnp.allclose(y2, x * f_ref, rtol=1e-6, atol=1e-6)

    # A slightly longer signal to exercise the 2-D tiling path (T > block_t).
    B2, C2, T2 = 2, 4, 8192
    kx2, kt2 = jax.random.split(jax.random.PRNGKey(1))
    x_long = jax.random.normal(kx2, (B2, C2, T2), dtype=jnp.float32)
    y_long, _, _ = rand_amp_att_1d(x_long, kt2, chance=1.0, factor=2.0,
                                   faithful=False)
    y_long = jax.block_until_ready(y_long)
    _, k_factor2 = jax.random.split(kt2)
    f_ref2 = jax.random.uniform(k_factor2, minval=0.5, maxval=2.0)
    assert jnp.allclose(y_long, x_long * f_ref2, rtol=1e-6, atol=1e-6)

    print("KERNEL_OK")
</pallas_src>

<mosaic_0001>
module attributes {stable_mosaic.version = 11 : i64} {
  func.func @_scale_kernel(%arg0: i32, %arg1: i32, %arg2: memref<1xf32, #tpu.memory_space<smem>>, %arg3: memref<8x256xf32, #tpu.memory_space<vmem>>, %arg4: memref<8x256xf32, #tpu.memory_space<vmem>>) attributes {dimension_semantics = [#tpu.dimension_semantics<parallel>, #tpu.dimension_semantics<parallel>], iteration_bounds = array<i64: 1, 1>, scalar_prefetch = 0 : i64, scratch_operands = 0 : i64, tpu.core_type = #tpu.core_type<tc>, window_params = [{transform_indices = @transform_0, window_bounds = array<i64: 1>}, {transform_indices = @transform_1, window_bounds = array<i64: 8, 256>}, {transform_indices = @transform_2, window_bounds = array<i64: 8, 256>}]} {
    %c0 = arith.constant 0 : index
    %c0_0 = arith.constant 0 : index
    %0 = vector.load %arg3[%c0, %c0_0] : memref<8x256xf32, #tpu.memory_space<vmem>>, vector<8x256xf32>
    %c0_1 = arith.constant 0 : index
    %1 = memref.load %arg2[%c0_1] : memref<1xf32, #tpu.memory_space<smem>>
    %2 = vector.broadcast %1 : f32 to vector<8x256xf32>
    %3 = arith.mulf %0, %2 : vector<8x256xf32>
    %c0_2 = arith.constant 0 : index
    %c0_3 = arith.constant 0 : index
    %4 = vector.load %arg4[%c0_2, %c0_3] : memref<8x256xf32, #tpu.memory_space<vmem>>, vector<8x256xf32>
    tpu.vector_store %arg4[%c0_2, %c0_3], %3 {strides = array<i32>} : memref<8x256xf32, #tpu.memory_space<vmem>>, vector<8x256xf32>,
    return
  }
  func.func @transform_0(%arg0: i32, %arg1: i32) -> i32 {
    %c0_i32 = arith.constant 0 : i32
    %c0_i32_0 = arith.constant 0 : i32
    return %c0_i32 : i32
  }
  func.func @transform_1(%arg0: i32, %arg1: i32) -> (i32, i32) {
    %c0_i32 = arith.constant 0 : i32
    return %arg0, %arg1 : i32, i32
  }
  func.func @transform_2(%arg0: i32, %arg1: i32) -> (i32, i32) {
    %c0_i32 = arith.constant 0 : i32
    return %arg0, %arg1 : i32, i32
  }
}

</mosaic_0001>

<llo_original>
// kernel: _scale_pallas.1
$region0: #{_scale_pallas.1}
  #allocation0 [shape = 'u32[]', space=smem, size = 0x4, offset = 0x4, fixed_abs, tag = 'smem constant byte address 0x4 - core index']
  #allocation1 [shape = 'u32[144,128]{1,0:T(1,128)}', space=vmem, size = 0x12000, scoped, tag = 'internal scratch']
  #allocation2 [shape = 'f32[1]{0:T(128)S(6)}', space=smem, size = 0x200, scoped, tag = 'scoped memory for _scale_pallas.1']
  %s0 = inlined_call_operand.<no memory space> [shape: f32[1], index: 0, kind: input, shape index: {}]
  %s1 = inlined_call_operand.hbm [shape: f32[8,256], index: 1, kind: input, shape index: {}, may-alias: {1,2}]
  %s2 = inlined_call_operand.hbm [shape: f32[8,256], index: 2, kind: output, shape index: {}, may-alias: {1,2}]
  %s3 = sld [smem:[#allocation0]]
  $region22: #{_scale_pallas.1} parent=0
    _
  %s5 = ssub.s32 1, %s3
  %s6 = scalar_select 0, %s5, %s3
  %7 = sst [smem:[#allocation2]] %s0
  $region1: #{_scale_pallas.1} parent=0
    #allocation3 [shape = 'u8[8192]{0}', space=vmem, size = 0x2000, scoped, tag = 'input window, operand 1, single buffered']
    #allocation4 [shape = 's32[1]{0}', space=sflag, size = 0x4, scoped, tag = 'scoped memory for _scale_pallas.1']
    #allocation5 [shape = 's32[1]{0}', space=sflag, size = 0x4, scoped, tag = 'scoped memory for _scale_pallas.1']
    #allocation6 [shape = 'u8[8192]{0}', space=vmem, size = 0x2000, scoped, tag = 'output window, operand 0, single buffered']
    %8 = vsyncpa [#allocation4], 0
    %9 = vsyncpa [#allocation5], 0
    // Predicated region
    $region2: #{_scale_pallas.1} parent=1 // pred_check
      _
    $region3: #{_scale_pallas.1} parent=1 // pred_check_branch
      %11 = sbr.rel (0) target = $region5
    $region4: #{_scale_pallas.1} parent=1 // pred_region
      _
    $region5: #{_scale_pallas.1} parent=1 // pred_fallthru
      _
    // Predicated region
    $region6: #{_scale_pallas.1} parent=1 // pred_check
      _
    $region7: #{_scale_pallas.1} parent=1 // pred_check_branch
      %13 = sbr.rel (0) target = $region9
    $region8: #{_scale_pallas.1} parent=1 // pred_region
      %s15 = ssub.s32 256, 256
      %16 = vsyncadd [#allocation4], %s15
      %s18 = sshll.u32 [#allocation3], 4
      %s19 = int_to_ptr.vmem [resolvable:$true] %s18
      %21 = dma.hbm_to_vmem [thread:$0]  %s1, 256, %s19, [#allocation4]
    $region9: #{_scale_pallas.1} parent=1 // pred_fallthru
      _
    // Predicated region
    $region10: #{_scale_pallas.1} parent=1 // pred_check
      _
    $region11: #{_scale_pallas.1} parent=1 // pred_check_branch
      %23 = sbr.rel (0) target = $region13
    $region12: #{_scale_pallas.1} parent=1 // pred_region
      %24 = dma.done [#allocation4], 256
    $region13: #{_scale_pallas.1} parent=1 // pred_fallthru
      _
    %v25 = vld [vmem:[#allocation3] sm:$0xff]
    %v26 = vld [vmem:[#allocation3 + $0x8] sm:$0xff]
    %s27 = sld [smem:[#allocation2]]
    %v28 = vstv %s27
    %v29 = vmul.f32 %v25, %v28
    %v30 = vmul.f32 %v26, %v28
    %31 = vst [vmem:[#allocation6] sm:$0xff] %v29
    %32 = vst [vmem:[#allocation6 + $0x8] sm:$0xff] %v30
    // Predicated region
    $region14: #{_scale_pallas.1} parent=1 // pred_check
      _
    $region15: #{_scale_pallas.1} parent=1 // pred_check_branch
      %34 = sbr.rel (0) target = $region17
    $region16: #{_scale_pallas.1} parent=1 // pred_region
      %s36 = ssub.s32 256, 256
      %37 = vsyncadd [#allocation5], %s36
      %s39 = sshll.u32 [#allocation6], 4
      %s40 = int_to_ptr.vmem [resolvable:$true] %s39
      %42 = dma.vmem_to_hbm [thread:$0]  %s40, 256, %s2, [#allocation5]
    $region17: #{_scale_pallas.1} parent=1 // pred_fallthru
      _
    // Predicated region
    $region18: #{_scale_pallas.1} parent=1 // pred_check
      _
    $region19: #{_scale_pallas.1} parent=1 // pred_check_branch
      %44 = sbr.rel (0) target = $region21
    $region20: #{_scale_pallas.1} parent=1 // pred_region
      %45 = dma.done [#allocation5], 256
    $region21: #{_scale_pallas.1} parent=1 // pred_fallthru
      _
    %46 = vsyncpa [#allocation4], 1
    %47 = vsyncpa [#allocation5], 1

</llo_original>
